<compile_context>
chip_gen: v7x
topology: tpu7x:2x2x1
jax: 0.10.0
libtpu: 0.0.40
codegen_flags: <defaults>
</compile_context>

<pallas_src>
import jax
import jax.numpy as jnp
from jax.experimental import pallas as pl
from jax.experimental.pallas import tpu as pltpu


def _round_up(x, m):
    return (x + m - 1) // m * m


def film_kernel(x_ref, cond_ref, w_ref, b_ref, o_ref):
    tf = x_ref.shape[1]
    cond = cond_ref[...]
    # Single fused projection on the MXU, f32 accumulate:
    #   [gamma+1 | beta] = cond @ [Wg | Wb] + [bg+1 | bb]
    gb = jnp.dot(cond, w_ref[...], preferred_element_type=jnp.float32) + b_ref[...]
    gamma_p1 = gb[:, :tf]
    beta = gb[:, tf:]
    # FiLM modulation on the VPU ("+1" already folded into gamma bias).
    o_ref[...] = (gamma_p1 * x_ref[...].astype(jnp.float32) + beta).astype(o_ref.dtype)


def film_layer(x, condition, wg, bg, wb, bb, *, bm=256, tf_max=2048,
               vmem_budget_bytes=44 * 1024 * 1024):
    """FiLM forward: (1 + cond @ Wg + bg) * x + (cond @ Wb + bb).

    x:         (B, F)
    condition: (B, C)
    wg, wb:    (C, F)   (already transposed from PyTorch's (F, C))
    bg, bb:    (F,) or (1, F)
    """
    B, F = x.shape
    Bc, C = condition.shape
    assert Bc == B, "x and condition must share the batch dimension"
    bg = jnp.reshape(bg, (1, F))
    bb = jnp.reshape(bb, (1, F))

    # ---- F tiling (lane axis): always lane-dense multiples of 128.
    F128 = _round_up(F, 128)
    tf = F128 if F128 <= tf_max else tf_max
    Fp = _round_up(F128, tf)
    nF = Fp // tf

    # ---- B tiling: big tiles, clamped + padded (no divisibility assert).
    bm = min(bm, _round_up(B, 8))

    def _need(bm_):  # double-buffered f32 working set per grid step
        return 4 * 2 * (2 * bm_ * tf + bm_ * C + 2 * C * tf + 2 * tf)

    while bm > 8 and _need(bm) > vmem_budget_bytes:
        bm = max(8, bm // 2)
    Bp = _round_up(B, bm)

    # ---- host-side prep: pad, fold +1 into gamma bias, block-interleave
    #      [Wg | Wb] so each F-tile j sees a contiguous (C, 2*tf) slab.
    xp = jnp.pad(x, ((0, Bp - B), (0, Fp - F)))
    cp = jnp.pad(condition, ((0, Bp - B), (0, 0)))

    def _pad_f(a):
        return jnp.pad(a, ((0, 0), (0, Fp - F)))

    wgp, wbp = _pad_f(wg), _pad_f(wb)
    bgp, bbp = _pad_f(bg + 1.0), _pad_f(bb)
    w_fused = jnp.concatenate(
        [wgp.reshape(C, nF, tf), wbp.reshape(C, nF, tf)], axis=2
    ).reshape(C, 2 * Fp)
    b_fused = jnp.concatenate(
        [bgp.reshape(1, nF, tf), bbp.reshape(1, nF, tf)], axis=2
    ).reshape(1, 2 * Fp)

    grid = (Bp // bm, nF)
    vmem_limit = int(min(max(_need(bm) + (4 << 20), 32 << 20), 48 << 20))

    out = pl.pallas_call(
        film_kernel,
        out_shape=jax.ShapeDtypeStruct((Bp, Fp), x.dtype),
        grid_spec=pltpu.PrefetchScalarGridSpec(
            num_scalar_prefetch=0,
            grid=grid,
            in_specs=[
                pl.BlockSpec((bm, tf), lambda i, j: (i, j)),      # x tile
                pl.BlockSpec((bm, C), lambda i, j: (i, 0)),       # condition tile
                pl.BlockSpec((C, 2 * tf), lambda i, j: (0, j)),   # fused [Wg|Wb] tile
                pl.BlockSpec((1, 2 * tf), lambda i, j: (0, j)),   # fused [bg+1|bb] tile
            ],
            out_specs=pl.BlockSpec((bm, tf), lambda i, j: (i, j)),
        ),
        compiler_params=pltpu.CompilerParams(
            dimension_semantics=("parallel", "parallel"),
            vmem_limit_bytes=vmem_limit,
        ),
    )(xp, cp, w_fused, b_fused)
    return out[:B, :F]


def film_ref(x, condition, wg, bg, wb, bb):
    gamma = condition @ wg + jnp.reshape(bg, (1, -1))
    beta = condition @ wb + jnp.reshape(bb, (1, -1))
    return (1.0 + gamma) * x + beta


if __name__ == "__main__":
    # Small shapes consistent with the module's forward:
    #   x: (batch, num_features), condition: (batch, condition_dim)
    # B is not a multiple of the batch tile and F is not a multiple of 128,
    # exercising the clamp/pad paths; the padded grid is (2, 1).
    B, F, C = 384, 200, 32

    key = jax.random.PRNGKey(0)
    kx, kc, kwg, kwb = jax.random.split(key, 4)

    x = jax.random.normal(kx, (B, F), dtype=jnp.float32)
    condition = jax.random.normal(kc, (B, C), dtype=jnp.float32)

    # The PyTorch module zero-inits gamma/beta weights & biases; small random
    # weights are also used to actually exercise the fused matmul path.
    wg = 0.02 * jax.random.normal(kwg, (C, F), dtype=jnp.float32)
    wb = 0.02 * jax.random.normal(kwb, (C, F), dtype=jnp.float32)
    bg = jnp.zeros((1, F), dtype=jnp.float32)
    bb = jnp.zeros((1, F), dtype=jnp.float32)

    out = jax.block_until_ready(film_layer(x, condition, wg, bg, wb, bb))
    ref = film_ref(x, condition, wg, bg, wb, bb)
    assert out.shape == (B, F), "output shape mismatch"
    assert jnp.allclose(out, ref, atol=1e-5, rtol=1e-5), "mismatch vs reference"

    # Zero-initialized parameters (matching nn.init.zeros_): output == x.
    wg_zero = jnp.zeros((C, F), dtype=jnp.float32)
    wb_zero = jnp.zeros((C, F), dtype=jnp.float32)
    out_zero = jax.block_until_ready(
        film_layer(x, condition, wg_zero, bg, wb_zero, bb))
    assert jnp.allclose(out_zero, x, atol=1e-6), "zero-init should be identity"

    print("KERNEL_OK")
</pallas_src>

<mosaic_0001>
module attributes {stable_mosaic.version = 11 : i64} {
  func.func @film_kernel(%arg0: i32, %arg1: i32, %arg2: memref<256x256xf32, #tpu.memory_space<vmem>>, %arg3: memref<256x32xf32, #tpu.memory_space<vmem>>, %arg4: memref<32x512xf32, #tpu.memory_space<vmem>>, %arg5: memref<1x512xf32, #tpu.memory_space<vmem>>, %arg6: memref<256x256xf32, #tpu.memory_space<vmem>>) attributes {dimension_semantics = [#tpu.dimension_semantics<parallel>, #tpu.dimension_semantics<parallel>], iteration_bounds = array<i64: 2, 1>, scalar_prefetch = 0 : i64, scratch_operands = 0 : i64, tpu.core_type = #tpu.core_type<tc>, window_params = [{transform_indices = @transform_0, window_bounds = array<i64: 256, 256>}, {transform_indices = @transform_1, window_bounds = array<i64: 256, 32>}, {transform_indices = @transform_2, window_bounds = array<i64: 32, 512>}, {transform_indices = @transform_3, window_bounds = array<i64: 1, 512>}, {transform_indices = @transform_4, window_bounds = array<i64: 256, 256>}]} {
    %c0 = arith.constant 0 : index
    %c0_0 = arith.constant 0 : index
    %0 = vector.load %arg3[%c0, %c0_0] : memref<256x32xf32, #tpu.memory_space<vmem>>, vector<256x32xf32>
    %c0_1 = arith.constant 0 : index
    %c0_2 = arith.constant 0 : index
    %1 = vector.load %arg4[%c0_1, %c0_2] : memref<32x512xf32, #tpu.memory_space<vmem>>, vector<32x512xf32>
    %cst = arith.constant dense<0.000000e+00> : vector<256x512xf32>
    %2 = tpu.matmul %0, %1, %cst {dimension_numbers = #tpu.dot_dimension_numbers<[1], [0], [0], [1], [0, 0, 1, 1], [], []>} : vector<256x32xf32>, vector<32x512xf32>, vector<256x512xf32> -> vector<256x512xf32>
    %c0_3 = arith.constant 0 : index
    %c0_4 = arith.constant 0 : index
    %3 = vector.load %arg5[%c0_3, %c0_4] : memref<1x512xf32, #tpu.memory_space<vmem>>, vector<1x512xf32>
    %4 = vector.broadcast %3 : vector<1x512xf32> to vector<256x512xf32>
    %5 = arith.addf %2, %4 : vector<256x512xf32>
    %6 = vector.extract_strided_slice %5 {offsets = [0, 0], sizes = [256, 256], strides = [1, 1]} : vector<256x512xf32> to vector<256x256xf32>
    %7 = vector.extract_strided_slice %5 {offsets = [0, 256], sizes = [256, 256], strides = [1, 1]} : vector<256x512xf32> to vector<256x256xf32>
    %c0_5 = arith.constant 0 : index
    %c0_6 = arith.constant 0 : index
    %8 = vector.load %arg2[%c0_5, %c0_6] : memref<256x256xf32, #tpu.memory_space<vmem>>, vector<256x256xf32>
    %9 = arith.mulf %6, %8 : vector<256x256xf32>
    %10 = arith.addf %9, %7 : vector<256x256xf32>
    %c0_7 = arith.constant 0 : index
    %c0_8 = arith.constant 0 : index
    %11 = vector.load %arg6[%c0_7, %c0_8] : memref<256x256xf32, #tpu.memory_space<vmem>>, vector<256x256xf32>
    tpu.vector_store %arg6[%c0_7, %c0_8], %10 {strides = array<i32>} : memref<256x256xf32, #tpu.memory_space<vmem>>, vector<256x256xf32>,
    return
  }
  func.func @transform_0(%arg0: i32, %arg1: i32) -> (i32, i32) {
    %c0_i32 = arith.constant 0 : i32
    return %arg0, %arg1 : i32, i32
  }
  func.func @transform_1(%arg0: i32, %arg1: i32) -> (i32, i32) {
    %c0_i32 = arith.constant 0 : i32
    %c0_i32_0 = arith.constant 0 : i32
    return %arg0, %c0_i32 : i32, i32
  }
  func.func @transform_2(%arg0: i32, %arg1: i32) -> (i32, i32) {
    %c0_i32 = arith.constant 0 : i32
    %c0_i32_0 = arith.constant 0 : i32
    return %c0_i32, %arg1 : i32, i32
  }
  func.func @transform_3(%arg0: i32, %arg1: i32) -> (i32, i32) {
    %c0_i32 = arith.constant 0 : i32
    %c0_i32_0 = arith.constant 0 : i32
    return %c0_i32, %arg1 : i32, i32
  }
  func.func @transform_4(%arg0: i32, %arg1: i32) -> (i32, i32) {
    %c0_i32 = arith.constant 0 : i32
    return %arg0, %arg1 : i32, i32
  }
}

</mosaic_0001>

<llo_original>
// kernel: tpu_custom_call.1
$region0: #{tpu_custom_call.1}
  #allocation0 [shape = 'u32[]', space=smem, size = 0x4, offset = 0x4, fixed_abs, tag = 'smem constant byte address 0x4 - core index']
  #allocation1 [shape = 'u32[144,128]{1,0:T(1,128)}', space=vmem, size = 0x12000, scoped, tag = 'internal scratch']
  %s0 = inlined_call_operand.hbm [shape: f32[512,256], index: 0, kind: input, shape index: {}]
  %s1 = inlined_call_operand.vmem [shape: f32[512,32], index: 1, kind: input, shape index: {}]
  %s2 = inlined_call_operand.vmem [shape: f32[32,512], index: 2, kind: input, shape index: {}]
  %s3 = inlined_call_operand.vmem [shape: f32[1,512], index: 3, kind: input, shape index: {}]
  %s4 = inlined_call_operand.hbm [shape: f32[512,256], index: 4, kind: output, shape index: {}]
  %s5 = sld [smem:[#allocation0]]
  $region53: #{tpu_custom_call.1} parent=0
    _
  %s7 = ssub.s32 1, %s5
  %s8 = scalar_select 0, %s7, %s5
  $region1: #{tpu_custom_call.1} parent=0
    #allocation2 [shape = 'u8[524288]{0}', space=vmem, size = 0x80000, scoped, tag = 'input window, operand 0']
    #allocation3 [shape = 's32[2]{0}', space=sflag, size = 0x8, scoped, tag = 'scoped memory for tpu_custom_call.1']
    #allocation4 [shape = 's32[2]{0}', space=sflag, size = 0x8, scoped, tag = 'scoped memory for tpu_custom_call.1']
    #allocation5 [shape = 'u8[524288]{0}', space=vmem, size = 0x80000, scoped, tag = 'output window, operand 0']
    %9 = vsyncpa [#allocation3], 0
    %s10 = scalar_lea.sflag [#allocation3], 1
    %11 = vsyncpa %s10, 0
    %12 = vsyncpa [#allocation4], 0
    %s13 = scalar_lea.sflag [#allocation4], 1
    %14 = vsyncpa %s13, 0
    loop: start=0, step=1, limit=4
    $region2: #{tpu_custom_call.1} parent=1 // loop_pre_header
      _
    $region3: #{tpu_custom_call.1} parent=1 // loop_header
      %s16 = sphi 0, %s20
      %p17 = scmp.ge.s32.totalorder %s16, 4
      %s23 = sphi 0, %s35
      %s24 = sphi 0, %s31
      %s25 = sphi 0, %s23
      %s26 = sphi 0, %s24
      %s27 = sphi 0, %s25
      %s28 = sphi 0, %s26
      %s40 = sphi 0, %s42
      %s43 = sphi 0, %s40
      %s44 = sphi 0, %s43
      %s60 = sphi 0, %s44
      %s66 = sphi 0, %s68
      %s69 = sphi 0, %s66
      %s70 = sphi 0, %s69
      %s86 = sphi 0, %s70
      %s92 = sphi 0, %s94
      %s95 = sphi 0, %s92
      %s96 = sphi 0, %s95
      %s112 = sphi 0, %s96
      %s118 = sphi 0, %s120
      %s121 = sphi 0, %s118
      %s122 = sphi 0, %s121
      %s138 = sphi 0, %s122
      %s146 = sphi 0, %s148
      %s149 = sphi 0, %s146
      %s150 = sphi 0, %s149
      %s166 = sphi 0, %s150
    $region4: #{tpu_custom_call.1} parent=1 // loop_header_branch
      %19 = sbr.rel (%p17) target = $region8
    $region5: #{tpu_custom_call.1} parent=1 // loop_body
      %s21 = ssub.s32 %s16, 1
      %s22 = ssub.s32 %s16, 2
      %s29 = sadd.s32 1, %s24
      %p30 = scmp.ge.s32.totalorder %s29, 1
      %s31 = scalar_select %p30, 0, %s29
      %s32 = sadd.s32 1, %s23
      %s33 = scalar_select %p30, %s32, %s23
      %p34 = scmp.ge.s32.totalorder %s33, 2
      %s35 = scalar_select %p34, 0, %s33
      %s36 = ssub.s32 %s23, %s35
      %s37 = ssub.s32 %s24, %s31
      %s38 = sor.u32 %s36, %s37
      %p39 = scmp.eq.s32.totalorder %s38, 0
      %s41 = sadd.s32 %s40, 1
      %s42 = scalar_select %p39, %s40, %s41
      %p45 = pneg %p39
      %p46 = scmp.eq.s32.totalorder %s16, 1
      %p47 = por %p45, %p46
      %p48 = scmp.ne.s32.totalorder %s40, %s43
      %p49 = scmp.eq.s32.totalorder %s16, 0
      %p50 = por %p48, %p49
      %p51 = scmp.ne.s32.totalorder %s40, %s43
      %p52 = scmp.eq.s32.totalorder %s21, 1
      %p53 = por %p51, %p52
      %p54 = scmp.ne.s32.totalorder %s43, %s44
      %p55 = scmp.eq.s32.totalorder %s21, 0
      %p56 = por %p54, %p55
      %p57 = scmp.ne.s32.totalorder %s43, %s44
      %p58 = scmp.eq.s32.totalorder %s22, 1
      %p59 = por %p57, %p58
      %p61 = scmp.ne.s32.totalorder %s44, %s60
      %p62 = scmp.eq.s32.totalorder %s22, 0
      %p63 = por %p61, %p62
      %s64 = ssub.s32 %s23, %s35
      %p65 = scmp.eq.s32.totalorder %s64, 0
      %s67 = sadd.s32 %s66, 1
      %s68 = scalar_select %p65, %s66, %s67
      %p71 = pneg %p65
      %p72 = scmp.eq.s32.totalorder %s16, 1
      %p73 = por %p71, %p72
      %p74 = scmp.ne.s32.totalorder %s66, %s69
      %p75 = scmp.eq.s32.totalorder %s16, 0
      %p76 = por %p74, %p75
      %p77 = scmp.ne.s32.totalorder %s66, %s69
      %p78 = scmp.eq.s32.totalorder %s21, 1
      %p79 = por %p77, %p78
      %p80 = scmp.ne.s32.totalorder %s69, %s70
      %p81 = scmp.eq.s32.totalorder %s21, 0
      %p82 = por %p80, %p81
      %p83 = scmp.ne.s32.totalorder %s69, %s70
      %p84 = scmp.eq.s32.totalorder %s22, 1
      %p85 = por %p83, %p84
      %p87 = scmp.ne.s32.totalorder %s70, %s86
      %p88 = scmp.eq.s32.totalorder %s22, 0
      %p89 = por %p87, %p88
      %s90 = ssub.s32 %s24, %s31
      %p91 = scmp.eq.s32.totalorder %s90, 0
      %s93 = sadd.s32 %s92, 1
      %s94 = scalar_select %p91, %s92, %s93
      %p97 = pneg %p91
      %p98 = scmp.eq.s32.totalorder %s16, 1
      %p99 = por %p97, %p98
      %p100 = scmp.ne.s32.totalorder %s92, %s95
      %p101 = scmp.eq.s32.totalorder %s16, 0
      %p102 = por %p100, %p101
      %p103 = scmp.ne.s32.totalorder %s92, %s95
      %p104 = scmp.eq.s32.totalorder %s21, 1
      %p105 = por %p103, %p104
      %p106 = scmp.ne.s32.totalorder %s95, %s96
      %p107 = scmp.eq.s32.totalorder %s21, 0
      %p108 = por %p106, %p107
      %p109 = scmp.ne.s32.totalorder %s95, %s96
      %p110 = scmp.eq.s32.totalorder %s22, 1
      %p111 = por %p109, %p110
      %p113 = scmp.ne.s32.totalorder %s96, %s112
      %p114 = scmp.eq.s32.totalorder %s22, 0
      %p115 = por %p113, %p114
      %s116 = ssub.s32 %s24, %s31
      %p117 = scmp.eq.s32.totalorder %s116, 0
      %s119 = sadd.s32 %s118, 1
      %s120 = scalar_select %p117, %s118, %s119
      %p123 = pneg %p117
      %p124 = scmp.eq.s32.totalorder %s16, 1
      %p125 = por %p123, %p124
      %p126 = scmp.ne.s32.totalorder %s118, %s121
      %p127 = scmp.eq.s32.totalorder %s16, 0
      %p128 = por %p126, %p127
      %p129 = scmp.ne.s32.totalorder %s118, %s121
      %p130 = scmp.eq.s32.totalorder %s21, 1
      %p131 = por %p129, %p130
      %p132 = scmp.ne.s32.totalorder %s121, %s122
      %p133 = scmp.eq.s32.totalorder %s21, 0
      %p134 = por %p132, %p133
      %p135 = scmp.ne.s32.totalorder %s121, %s122
      %p136 = scmp.eq.s32.totalorder %s22, 1
      %p137 = por %p135, %p136
      %p139 = scmp.ne.s32.totalorder %s122, %s138
      %p140 = scmp.eq.s32.totalorder %s22, 0
      %p141 = por %p139, %p140
      %s142 = ssub.s32 %s23, %s35
      %s143 = ssub.s32 %s24, %s31
      %s144 = sor.u32 %s142, %s143
      %p145 = scmp.eq.s32.totalorder %s144, 0
      %s147 = sadd.s32 %s146, 1
      %s148 = scalar_select %p145, %s146, %s147
      %p151 = pneg %p145
      %p152 = scmp.eq.s32.totalorder %s16, 1
      %p153 = por %p151, %p152
      %p154 = scmp.ne.s32.totalorder %s146, %s149
      %p155 = scmp.eq.s32.totalorder %s16, 0
      %p156 = por %p154, %p155
      %p157 = scmp.ne.s32.totalorder %s146, %s149
      %p158 = scmp.eq.s32.totalorder %s21, 1
      %p159 = por %p157, %p158
      %p160 = scmp.ne.s32.totalorder %s149, %s150
      %p161 = scmp.eq.s32.totalorder %s21, 0
      %p162 = por %p160, %p161
      %p163 = scmp.ne.s32.totalorder %s149, %s150
      %p164 = scmp.eq.s32.totalorder %s22, 1
      %p165 = por %p163, %p164
      %p167 = scmp.ne.s32.totalorder %s150, %s166
      %p168 = scmp.eq.s32.totalorder %s22, 0
      %p169 = por %p167, %p168
      %p170 = scmp.le.s32.totalorder 1, %s16
      %p171 = scmp.lt.s32.totalorder %s16, 3
      %p172 = pnand %p170, %p171
      %p173 = pneg %p172
      // Predicated region
      $region9: #{tpu_custom_call.1} parent=5 // pred_check
        _
      $region10: #{tpu_custom_call.1} parent=5 // pred_check_branch
        %175 = sbr.rel (%p172) target = $region12
      $region11: #{tpu_custom_call.1} parent=5 // pred_region
        %s176 = ssub.s32 %s16, 1
        // Predicated region
        $region13: #{tpu_custom_call.1} parent=11 // pred_check
          %p177 = pneg %p108
        $region14: #{tpu_custom_call.1} parent=11 // pred_check_branch
          %179 = sbr.rel (%p177) target = $region16
        $region15: #{tpu_custom_call.1} parent=11 // pred_region
          %s180 = smul.u32 4, %s26
          %p181 = scmp.lt.s32.totalorder %s180, 3
          %s182 = scalar_select %p181, %s180, 3
          %s183 = smul.addr %s182, 8
          %s184 = scalar_lea.vmem %s2, %s183
          %s185 = smul.u32 4, %s26
        $region16: #{tpu_custom_call.1} parent=11 // pred_fallthru
          _
        // Predicated region
        $region17: #{tpu_custom_call.1} parent=11 // pred_check
          %p186 = pneg %p134
        $region18: #{tpu_custom_call.1} parent=11 // pred_check_branch
          %188 = sbr.rel (%p186) target = $region20
        $region19: #{tpu_custom_call.1} parent=11 // pred_region
          %s189 = smul.u32 4, %s26
          %p190 = scmp.lt.s32.totalorder %s189, 3
          %s191 = scalar_select %p190, %s189, 3
          %s192 = scalar_lea.vmem %s3, %s191
          %s193 = smul.u32 4, %s26
        $region20: #{tpu_custom_call.1} parent=11 // pred_fallthru
          _
      $region12: #{tpu_custom_call.1} parent=5 // pred_fallthru
        _
      %p194 = scmp.lt.s32.totalorder %s16, 2
      // Predicated region
      $region21: #{tpu_custom_call.1} parent=5 // pred_check
        %p195 = pneg %p194
      $region22: #{tpu_custom_call.1} parent=5 // pred_check_branch
        %197 = sbr.rel (%p195) target = $region24
      $region23: #{tpu_custom_call.1} parent=5 // pred_region
        // Predicated region
        $region25: #{tpu_custom_call.1} parent=23 // pred_check
          %p198 = pneg %p50
        $region26: #{tpu_custom_call.1} parent=23 // pred_check_branch
          %200 = sbr.rel (%p198) target = $region28
        $region27: #{tpu_custom_call.1} parent=23 // pred_region
          %s201 = sand.u32 %s40, 1
          %s202 = scalar_lea.sflag [#allocation3], %s201
          %s203 = sand.u32 %s40, 1
          %s204 = smul.addr %s203, 512
          %s205 = scalar_lea.vmem [#allocation2], %s204
          %s206 = smul.u32 32, %s23
          %s207 = smul.u32 2, %s24
          %s209 = ssub.s32 8192, 8192
          %210 = vsyncadd %s202, %s209
          %s211 = smul.addr %s206, 2
          %s212 = sadd.s32 %s207, %s211
          %s213 = smul.addr %s212, 128
          %s214 = scalar_lea.hbm %s0, %s213
          %s215 = sshll.u32 %s205, 4
          %s216 = int_to_ptr.vmem [resolvable:$true] %s215
          %221 = dma.hbm_to_vmem [thread:$0]  %s214, 8192, %s216, %s202, 256, 256, 16
        $region28: #{tpu_custom_call.1} parent=23 // pred_fallthru
          _
        // Predicated region
        $region29: #{tpu_custom_call.1} parent=23 // pred_check
          %p222 = pneg %p76
        $region30: #{tpu_custom_call.1} parent=23 // pred_check_branch
          %224 = sbr.rel (%p222) target = $region32
        $region31: #{tpu_custom_call.1} parent=23 // pred_region
          %s225 = smul.u32 32, %s23
          %p226 = scmp.lt.s32.totalorder %s225, 63
          %s227 = scalar_select %p226, %s225, 63
          %s228 = smul.addr %s227, 8
          %s229 = scalar_lea.vmem %s1, %s228
          %s230 = smul.u32 32, %s23
        $region32: #{tpu_custom_call.1} parent=23 // pred_fallthru
          _
      $region24: #{tpu_custom_call.1} parent=5 // pred_fallthru
        _
      %p231 = scmp.le.s32.totalorder 1, %s16
      %p232 = scmp.lt.s32.totalorder %s16, 3
      %p233 = pnand %p231, %p232
      %p234 = pneg %p233
      // Predicated region
      $region33: #{tpu_custom_call.1} parent=5 // pred_check
        _
      $region34: #{tpu_custom_call.1} parent=5 // pred_check_branch
        %236 = sbr.rel (%p233) target = $region36
      $region35: #{tpu_custom_call.1} parent=5 // pred_region
        %s237 = ssub.s32 %s16, 1
        %s238 = sand.u32 %s43, 1
        %s239 = scalar_lea.sflag [#allocation3], %s238
        %s240 = sand.u32 %s43, 1
        %s241 = smul.addr %s240, 512
        %s242 = scalar_lea.vmem [#allocation2], %s241
        // Predicated region
        $region37: #{tpu_custom_call.1} parent=35 // pred_check
          %p243 = pneg %p56
        $region38: #{tpu_custom_call.1} parent=35 // pred_check_branch
          %245 = sbr.rel (%p243) target = $region40
        $region39: #{tpu_custom_call.1} parent=35 // pred_region
          %246 = dma.done %s239, 8192
        $region40: #{tpu_custom_call.1} parent=35 // pred_fallthru
          _
        %s247 = sand.u32 %s43, 1
        %s248 = scalar_lea.sflag [#allocation3], %s247
        %s249 = sand.u32 %s43, 1
        %s250 = smul.addr %s249, 512
        %s251 = scalar_lea.vmem [#allocation2], %s250
        %p252 = pneg %p56
        %p253 = pneg %p53
        %s254 = smul.u32 32, %s25
        %p255 = scmp.lt.s32.totalorder %s254, 63
        %s256 = scalar_select %p255, %s254, 63
        %s257 = smul.addr %s256, 8
        %s258 = scalar_lea.vmem %s1, %s257
        %p259 = pneg %p82
        %p260 = pneg %p79
        %s261 = smul.u32 4, %s26
        %p262 = scmp.lt.s32.totalorder %s261, 3
        %s263 = scalar_select %p262, %s261, 3
        %s264 = smul.addr %s263, 8
        %s265 = scalar_lea.vmem %s2, %s264
        %p266 = pneg %p108
        %p267 = pneg %p105
        %s268 = smul.u32 4, %s26
        %p269 = scmp.lt.s32.totalorder %s268, 3
        %s270 = scalar_select %p269, %s268, 3
        %s271 = scalar_lea.vmem %s3, %s270
        %p272 = pneg %p134
        %p273 = pneg %p131
        %p274 = pneg %p162
        %p275 = pneg %p159
        %s276 = sand.u32 %s149, 1
        %s277 = scalar_lea.sflag [#allocation4], %s276
        %s278 = sand.u32 %s149, 1
        %s279 = smul.addr %s278, 512
        %s280 = scalar_lea.vmem [#allocation5], %s279
        %s281 = smul.u32 32, %s25
        %s282 = smul.u32 2, %s26
        %s283 = smul.u32 32, %s25
        %p284 = scmp.lt.s32.totalorder %s283, 63
        %s285 = scalar_select %p284, %s283, 63
        %s286 = smul.addr %s285, 8
        %s287 = scalar_lea.vmem %s1, %s286
        %s288 = smul.u32 32, %s25
        %s289 = smul.u32 4, %s26
        %p290 = scmp.lt.s32.totalorder %s289, 3
        %s291 = scalar_select %p290, %s289, 3
        %s292 = smul.addr %s291, 8
        %s293 = scalar_lea.vmem %s2, %s292
        %s294 = smul.u32 4, %s26
        %s295 = smul.u32 4, %s26
        %p296 = scmp.lt.s32.totalorder %s295, 3
        %s297 = scalar_select %p296, %s295, 3
        %s298 = scalar_lea.vmem %s3, %s297
        %s299 = smul.u32 4, %s26
        %s300 = smul.u32 32, %s25
        %s301 = smul.u32 2, %s26
        %v302 = vld [vmem:[%s287] sm:$0xff]
        %v303 = vld [vmem:[%s287 + $0x8] sm:$0xff]
        %v304 = vld [vmem:[%s287 + $0x10] sm:$0xff]
        %v305 = vld [vmem:[%s287 + $0x18] sm:$0xff]
        %v306 = vld [vmem:[%s287 + $0x20] sm:$0xff]
        %v307 = vld [vmem:[%s287 + $0x28] sm:$0xff]
        %v308 = vld [vmem:[%s287 + $0x30] sm:$0xff]
        %v309 = vld [vmem:[%s287 + $0x38] sm:$0xff]
        %v310 = vld [vmem:[%s287 + $0x40] sm:$0xff]
        %v311 = vld [vmem:[%s287 + $0x48] sm:$0xff]
        %v312 = vld [vmem:[%s287 + $0x50] sm:$0xff]
        %v313 = vld [vmem:[%s287 + $0x58] sm:$0xff]
        %v314 = vld [vmem:[%s287 + $0x60] sm:$0xff]
        %v315 = vld [vmem:[%s287 + $0x68] sm:$0xff]
        %v316 = vld [vmem:[%s287 + $0x70] sm:$0xff]
        %v317 = vld [vmem:[%s287 + $0x78] sm:$0xff]
        %v318 = vld [vmem:[%s287 + $0x80] sm:$0xff]
        %v319 = vld [vmem:[%s287 + $0x88] sm:$0xff]
        %v320 = vld [vmem:[%s287 + $0x90] sm:$0xff]
        %v321 = vld [vmem:[%s287 + $0x98] sm:$0xff]
        %v322 = vld [vmem:[%s287 + $0xa0] sm:$0xff]
        %v323 = vld [vmem:[%s287 + $0xa8] sm:$0xff]
        %v324 = vld [vmem:[%s287 + $0xb0] sm:$0xff]
        %v325 = vld [vmem:[%s287 + $0xb8] sm:$0xff]
        %v326 = vld [vmem:[%s287 + $0xc0] sm:$0xff]
        %v327 = vld [vmem:[%s287 + $0xc8] sm:$0xff]
        %v328 = vld [vmem:[%s287 + $0xd0] sm:$0xff]
        %v329 = vld [vmem:[%s287 + $0xd8] sm:$0xff]
        %v330 = vld [vmem:[%s287 + $0xe0] sm:$0xff]
        %v331 = vld [vmem:[%s287 + $0xe8] sm:$0xff]
        %v332 = vld [vmem:[%s287 + $0xf0] sm:$0xff]
        %v333 = vld [vmem:[%s287 + $0xf8] sm:$0xff]
        %v334 = vld [vmem:[%s293] sm:$0xff]
        %v335 = vld [vmem:[%s293 + $0x8] sm:$0xff]
        %v336 = vld [vmem:[%s293 + $0x10] sm:$0xff]
        %v337 = vld [vmem:[%s293 + $0x18] sm:$0xff]
        %v338 = vld [vmem:[%s293 + $0x20] sm:$0xff]
        %v339 = vld [vmem:[%s293 + $0x28] sm:$0xff]
        %v340 = vld [vmem:[%s293 + $0x30] sm:$0xff]
        %v341 = vld [vmem:[%s293 + $0x38] sm:$0xff]
        %v342 = vld [vmem:[%s293 + $0x40] sm:$0xff]
        %v343 = vld [vmem:[%s293 + $0x48] sm:$0xff]
        %v344 = vld [vmem:[%s293 + $0x50] sm:$0xff]
        %v345 = vld [vmem:[%s293 + $0x58] sm:$0xff]
        %v346 = vld [vmem:[%s293 + $0x60] sm:$0xff]
        %v347 = vld [vmem:[%s293 + $0x68] sm:$0xff]
        %v348 = vld [vmem:[%s293 + $0x70] sm:$0xff]
        %v349 = vld [vmem:[%s293 + $0x78] sm:$0xff]
        %v350 = vld [vmem:[%s298] sm:$0xf]
        %v352 = vlaneseq
        %v353 = vshrl.u32 %v352, 7
        %v354 = vsub.s32 0, %v353
        %v355 = vrot.slane %v350, %v354
        %v356 = vlaneseq
        %v357 = vshrl.u32 %v356, 7
        %v358 = vsub.s32 1, %v357
        %v359 = vrot.slane %v350, %v358
        %v360 = vlaneseq
        %v361 = vshrl.u32 %v360, 7
        %v362 = vsub.s32 2, %v361
        %v363 = vrot.slane %v350, %v362
        %v364 = vlaneseq
        %v365 = vshrl.u32 %v364, 7
        %v366 = vsub.s32 3, %v365
        %v367 = vrot.slane %v350, %v366
        %vm372 = vcmask 261120
        %v374 = vsel %vm372, %v302, 0
        %v377 = vsel %vm372, %v303, 0
        %v380 = vsel %vm372, %v304, 0
        %v383 = vsel %vm372, %v305, 0
        %v386 = vsel %vm372, %v306, 0
        %v389 = vsel %vm372, %v307, 0
        %v392 = vsel %vm372, %v308, 0
        %v395 = vsel %vm372, %v309, 0
        %v398 = vsel %vm372, %v310, 0
        %v401 = vsel %vm372, %v311, 0
        %v404 = vsel %vm372, %v312, 0
        %v407 = vsel %vm372, %v313, 0
        %v410 = vsel %vm372, %v314, 0
        %v413 = vsel %vm372, %v315, 0
        %v416 = vsel %vm372, %v316, 0
        %v419 = vsel %vm372, %v317, 0
        %v422 = vsel %vm372, %v318, 0
        %v425 = vsel %vm372, %v319, 0
        %v428 = vsel %vm372, %v320, 0
        %v431 = vsel %vm372, %v321, 0
        %v434 = vsel %vm372, %v322, 0
        %v437 = vsel %vm372, %v323, 0
        %v440 = vsel %vm372, %v324, 0
        %v443 = vsel %vm372, %v325, 0
        %v446 = vsel %vm372, %v326, 0
        %v449 = vsel %vm372, %v327, 0
        %v452 = vsel %vm372, %v328, 0
        %v455 = vsel %vm372, %v329, 0
        %v458 = vsel %vm372, %v330, 0
        %v461 = vsel %vm372, %v331, 0
        %v464 = vsel %vm372, %v332, 0
        %v467 = vsel %vm372, %v333, 0
        %469 = vmatprep.subr.mxu0 %v335
        %470 = vmatpush1.msra.mxu0 %v334
        %471 = vmatprep.subr.mxu0 %v339
        %472 = vmatpush1.msra.mxu0 %v338
        %473 = vmatprep.subr.mxu0 %v343
        %474 = vmatpush1.msra.mxu0 %v342
        %475 = vmatprep.subr.mxu0 %v347
        %476 = vmatpush1.msra.mxu0 %v346
        %477 = vmatprep.subr.mxu0 0.0
        %478 = vmatpush1.msra.mxu0 0.0
        %479 = vmatprep.subr.mxu0 0.0
        %480 = vmatpush1.msra.mxu0 0.0
        %481 = vmatprep.subr.mxu0 0.0
        %482 = vmatpush1.msra.mxu0 0.0
        %483 = vmatprep.subr.mxu0 0.0
        %484 = vmatpush1.msra.mxu0 0.0
        %485 = vmatprep.subr.mxu0 0.0
        %486 = vmatpush1.msra.mxu0 0.0
        %487 = vmatprep.subr.mxu0 0.0
        %488 = vmatpush1.msra.mxu0 0.0
        %489 = vmatprep.subr.mxu0 0.0
        %490 = vmatpush1.msra.mxu0 0.0
        %491 = vmatprep.subr.mxu0 0.0
        %492 = vmatpush1.msra.mxu0 0.0
        %493 = vmatprep.subr.mxu0 0.0
        %494 = vmatpush1.msra.mxu0 0.0
        %495 = vmatprep.subr.mxu0 0.0
        %496 = vmatpush1.msra.mxu0 0.0
        %497 = vmatprep.subr.mxu0 0.0
        %498 = vmatpush1.msra.mxu0 0.0
        %499 = vmatprep.subr.mxu0 0.0
        %500 = vmatpush1.msra.mxu0 0.0
        %501 = vmatprep.subr.mxu0 0.0
        %502 = vmatpush1.msra.mxu0 0.0
        %503 = vmatprep.subr.mxu0 0.0
        %504 = vmatpush1.msra.mxu0 0.0
        %505 = vmatprep.subr.mxu0 0.0
        %506 = vmatpush1.msra.mxu0 0.0
        %507 = vmatprep.subr.mxu0 0.0
        %508 = vmatpush1.msra.mxu0 0.0
        %509 = vmatprep.subr.mxu0 0.0
        %510 = vmatpush1.msra.mxu0 0.0
        %511 = vmatprep.subr.mxu0 0.0
        %512 = vmatpush1.msra.mxu0 0.0
        %513 = vmatprep.subr.mxu0 0.0
        %514 = vmatpush1.msra.mxu0 0.0
        %515 = vmatprep.subr.mxu0 0.0
        %516 = vmatpush1.msra.mxu0 0.0
        %517 = vmatprep.subr.mxu0 0.0
        %518 = vmatpush1.msra.mxu0 0.0
        %519 = vmatprep.subr.mxu0 0.0
        %520 = vmatpush1.msra.mxu0 0.0
        %521 = vmatprep.subr.mxu0 0.0
        %522 = vmatpush1.msra.mxu0 0.0
        %523 = vmatprep.subr.mxu0 0.0
        %524 = vmatpush1.msra.mxu0 0.0
        %525 = vmatprep.subr.mxu0 0.0
        %526 = vmatpush1.msra.mxu0 0.0
        %527 = vmatprep.subr.mxu0 0.0
        %528 = vmatpush1.msra.mxu0 0.0
        %529 = vmatprep.subr.mxu0 0.0
        %530 = vmatpush1.msra.mxu0 0.0
        %531 = vmatprep.subr.mxu0 0.0
        %532 = vmatpush1.msra.mxu0 0.0
        %533 = vmatprep.mubr.f32.mxu0 0.0
        %534 = vmatmul.mubr.f32.gmra.mrb[0].mxu0 %v374
        %v535 = vpop.f32.mrb[0].mxu0
        %v536 = vadd.f32 %v355, %v535
        %v537 = vpop.f32.mrb[0].mxu0
        %v538 = vadd.f32 %v359, %v537
        %539 = vmatprep.mubr.f32.mxu0 0.0
        %540 = vmatmul.mubr.f32.gmra.mrb[0].mxu0 %v377
        %v541 = vpop.f32.mrb[0].mxu0
        %v542 = vadd.f32 %v355, %v541
        %v543 = vpop.f32.mrb[0].mxu0
        %v544 = vadd.f32 %v359, %v543
        %545 = vmatprep.mubr.f32.mxu0 0.0
        %546 = vmatmul.mubr.f32.gmra.mrb[0].mxu0 %v380
        %v547 = vpop.f32.mrb[0].mxu0
        %v548 = vadd.f32 %v355, %v547
        %v549 = vpop.f32.mrb[0].mxu0
        %v550 = vadd.f32 %v359, %v549
        %551 = vmatprep.mubr.f32.mxu0 0.0
        %552 = vmatmul.mubr.f32.gmra.mrb[0].mxu0 %v383
        %v553 = vpop.f32.mrb[0].mxu0
        %v554 = vadd.f32 %v355, %v553
        %v555 = vpop.f32.mrb[0].mxu0
        %v556 = vadd.f32 %v359, %v555
        %557 = vmatprep.mubr.f32.mxu0 0.0
        %558 = vmatmul.mubr.f32.gmra.mrb[0].mxu0 %v386
        %v559 = vpop.f32.mrb[0].mxu0
        %v560 = vadd.f32 %v355, %v559
        %v561 = vpop.f32.mrb[0].mxu0
        %v562 = vadd.f32 %v359, %v561
        %563 = vmatprep.mubr.f32.mxu0 0.0
        %564 = vmatmul.mubr.f32.gmra.mrb[0].mxu0 %v389
        %v565 = vpop.f32.mrb[0].mxu0
        %v566 = vadd.f32 %v355, %v565
        %v567 = vpop.f32.mrb[0].mxu0
        %v568 = vadd.f32 %v359, %v567
        %569 = vmatprep.mubr.f32.mxu0 0.0
        %570 = vmatmul.mubr.f32.gmra.mrb[0].mxu0 %v392
        %v571 = vpop.f32.mrb[0].mxu0
        %v572 = vadd.f32 %v355, %v571
        %v573 = vpop.f32.mrb[0].mxu0
        %v574 = vadd.f32 %v359, %v573
        %575 = vmatprep.mubr.f32.mxu0 0.0
        %576 = vmatmul.mubr.f32.gmra.mrb[0].mxu0 %v395
        %v577 = vpop.f32.mrb[0].mxu0
        %v578 = vadd.f32 %v355, %v577
        %v579 = vpop.f32.mrb[0].mxu0
        %v580 = vadd.f32 %v359, %v579
        %581 = vmatprep.mubr.f32.mxu0 0.0
        %582 = vmatmul.mubr.f32.gmra.mrb[0].mxu0 %v398
        %v583 = vpop.f32.mrb[0].mxu0
        %v584 = vadd.f32 %v355, %v583
        %v585 = vpop.f32.mrb[0].mxu0
        %v586 = vadd.f32 %v359, %v585
        %587 = vmatprep.mubr.f32.mxu0 0.0
        %588 = vmatmul.mubr.f32.gmra.mrb[0].mxu0 %v401
        %v589 = vpop.f32.mrb[0].mxu0
        %v590 = vadd.f32 %v355, %v589
        %v591 = vpop.f32.mrb[0].mxu0
        %v592 = vadd.f32 %v359, %v591
        %593 = vmatprep.mubr.f32.mxu0 0.0
        %594 = vmatmul.mubr.f32.gmra.mrb[0].mxu0 %v404
        %v595 = vpop.f32.mrb[0].mxu0
        %v596 = vadd.f32 %v355, %v595
        %v597 = vpop.f32.mrb[0].mxu0
        %v598 = vadd.f32 %v359, %v597
        %599 = vmatprep.mubr.f32.mxu0 0.0
        %600 = vmatmul.mubr.f32.gmra.mrb[0].mxu0 %v407
        %v601 = vpop.f32.mrb[0].mxu0
        %v602 = vadd.f32 %v355, %v601
        %v603 = vpop.f32.mrb[0].mxu0
        %v604 = vadd.f32 %v359, %v603
        %605 = vmatprep.mubr.f32.mxu0 0.0
        %606 = vmatmul.mubr.f32.gmra.mrb[0].mxu0 %v410
        %v607 = vpop.f32.mrb[0].mxu0
        %v608 = vadd.f32 %v355, %v607
        %v609 = vpop.f32.mrb[0].mxu0
        %v610 = vadd.f32 %v359, %v609
        %611 = vmatprep.mubr.f32.mxu0 0.0
        %612 = vmatmul.mubr.f32.gmra.mrb[0].mxu0 %v413
        %v613 = vpop.f32.mrb[0].mxu0
        %v614 = vadd.f32 %v355, %v613
        %v615 = vpop.f32.mrb[0].mxu0
        %v616 = vadd.f32 %v359, %v615
        %617 = vmatprep.mubr.f32.mxu0 0.0
        %618 = vmatmul.mubr.f32.gmra.mrb[0].mxu0 %v416
        %v619 = vpop.f32.mrb[0].mxu0
        %v620 = vadd.f32 %v355, %v619
        %v621 = vpop.f32.mrb[0].mxu0
        %v622 = vadd.f32 %v359, %v621
        %623 = vmatprep.mubr.f32.mxu0 0.0
        %624 = vmatmul.mubr.f32.gmra.mrb[0].mxu0 %v419
        %v625 = vpop.f32.mrb[0].mxu0
        %v626 = vadd.f32 %v355, %v625
        %v627 = vpop.f32.mrb[0].mxu0
        %v628 = vadd.f32 %v359, %v627
        %629 = vmatprep.mubr.f32.mxu0 0.0
        %630 = vmatmul.mubr.f32.gmra.mrb[0].mxu0 %v422
        %v631 = vpop.f32.mrb[0].mxu0
        %v632 = vadd.f32 %v355, %v631
        %v633 = vpop.f32.mrb[0].mxu0
        %v634 = vadd.f32 %v359, %v633
        %635 = vmatprep.mubr.f32.mxu0 0.0
        %636 = vmatmul.mubr.f32.gmra.mrb[0].mxu0 %v425
        %v637 = vpop.f32.mrb[0].mxu0
        %v638 = vadd.f32 %v355, %v637
        %v639 = vpop.f32.mrb[0].mxu0
        %v640 = vadd.f32 %v359, %v639
        %641 = vmatprep.mubr.f32.mxu0 0.0
        %642 = vmatmul.mubr.f32.gmra.mrb[0].mxu0 %v428
        %v643 = vpop.f32.mrb[0].mxu0
        %v644 = vadd.f32 %v355, %v643
        %v645 = vpop.f32.mrb[0].mxu0
        %v646 = vadd.f32 %v359, %v645
        %647 = vmatprep.mubr.f32.mxu0 0.0
        %648 = vmatmul.mubr.f32.gmra.mrb[0].mxu0 %v431
        %v649 = vpop.f32.mrb[0].mxu0
        %v650 = vadd.f32 %v355, %v649
        %v651 = vpop.f32.mrb[0].mxu0
        %v652 = vadd.f32 %v359, %v651
        %653 = vmatprep.mubr.f32.mxu0 0.0
        %654 = vmatmul.mubr.f32.gmra.mrb[0].mxu0 %v434
        %v655 = vpop.f32.mrb[0].mxu0
        %v656 = vadd.f32 %v355, %v655
        %v657 = vpop.f32.mrb[0].mxu0
        %v658 = vadd.f32 %v359, %v657
        %659 = vmatprep.mubr.f32.mxu0 0.0
        %660 = vmatmul.mubr.f32.gmra.mrb[0].mxu0 %v437
        %v661 = vpop.f32.mrb[0].mxu0
        %v662 = vadd.f32 %v355, %v661
        %v663 = vpop.f32.mrb[0].mxu0
        %v664 = vadd.f32 %v359, %v663
        %665 = vmatprep.mubr.f32.mxu0 0.0
        %666 = vmatmul.mubr.f32.gmra.mrb[0].mxu0 %v440
        %v667 = vpop.f32.mrb[0].mxu0
        %v668 = vadd.f32 %v355, %v667
        %v669 = vpop.f32.mrb[0].mxu0
        %v670 = vadd.f32 %v359, %v669
        %671 = vmatprep.mubr.f32.mxu0 0.0
        %672 = vmatmul.mubr.f32.gmra.mrb[0].mxu0 %v443
        %v673 = vpop.f32.mrb[0].mxu0
        %v674 = vadd.f32 %v355, %v673
        %v675 = vpop.f32.mrb[0].mxu0
        %v676 = vadd.f32 %v359, %v675
        %677 = vmatprep.mubr.f32.mxu0 0.0
        %678 = vmatmul.mubr.f32.gmra.mrb[0].mxu0 %v446
        %v679 = vpop.f32.mrb[0].mxu0
        %v680 = vadd.f32 %v355, %v679
        %v681 = vpop.f32.mrb[0].mxu0
        %v682 = vadd.f32 %v359, %v681
        %683 = vmatprep.mubr.f32.mxu0 0.0
        %684 = vmatmul.mubr.f32.gmra.mrb[0].mxu0 %v449
        %v685 = vpop.f32.mrb[0].mxu0
        %v686 = vadd.f32 %v355, %v685
        %v687 = vpop.f32.mrb[0].mxu0
        %v688 = vadd.f32 %v359, %v687
        %689 = vmatprep.mubr.f32.mxu0 0.0
        %690 = vmatmul.mubr.f32.gmra.mrb[0].mxu0 %v452
        %v691 = vpop.f32.mrb[0].mxu0
        %v692 = vadd.f32 %v355, %v691
        %v693 = vpop.f32.mrb[0].mxu0
        %v694 = vadd.f32 %v359, %v693
        %695 = vmatprep.mubr.f32.mxu0 0.0
        %696 = vmatmul.mubr.f32.gmra.mrb[0].mxu0 %v455
        %v697 = vpop.f32.mrb[0].mxu0
        %v698 = vadd.f32 %v355, %v697
        %v699 = vpop.f32.mrb[0].mxu0
        %v700 = vadd.f32 %v359, %v699
        %701 = vmatprep.mubr.f32.mxu0 0.0
        %702 = vmatmul.mubr.f32.gmra.mrb[0].mxu0 %v458
        %v703 = vpop.f32.mrb[0].mxu0
        %v704 = vadd.f32 %v355, %v703
        %v705 = vpop.f32.mrb[0].mxu0
        %v706 = vadd.f32 %v359, %v705
        %707 = vmatprep.mubr.f32.mxu0 0.0
        %708 = vmatmul.mubr.f32.gmra.mrb[0].mxu0 %v461
        %v709 = vpop.f32.mrb[0].mxu0
        %v710 = vadd.f32 %v355, %v709
        %v711 = vpop.f32.mrb[0].mxu0
        %v712 = vadd.f32 %v359, %v711
        %713 = vmatprep.mubr.f32.mxu0 0.0
        %714 = vmatmul.mubr.f32.gmra.mrb[0].mxu0 %v464
        %v715 = vpop.f32.mrb[0].mxu0
        %v716 = vadd.f32 %v355, %v715
        %v717 = vpop.f32.mrb[0].mxu0
        %v718 = vadd.f32 %v359, %v717
        %719 = vmatprep.mubr.f32.mxu0 0.0
        %720 = vmatmul.mubr.f32.gmra.mrb[0].mxu0 %v467
        %v721 = vpop.f32.mrb[0].mxu0
        %v722 = vadd.f32 %v355, %v721
        %v723 = vpop.f32.mrb[0].mxu0
        %v724 = vadd.f32 %v359, %v723
        %725 = vdwg.mxu0
        %726 = vmatprep.subr.mxu0 %v337
        %727 = vmatpush1.msra.mxu0 %v336
        %728 = vmatprep.subr.mxu0 %v341
        %729 = vmatpush1.msra.mxu0 %v340
        %730 = vmatprep.subr.mxu0 %v345
        %731 = vmatpush1.msra.mxu0 %v344
        %732 = vmatprep.subr.mxu0 %v349
        %733 = vmatpush1.msra.mxu0 %v348
        %734 = vmatprep.subr.mxu0 0.0
        %735 = vmatpush1.msra.mxu0 0.0
        %736 = vmatprep.subr.mxu0 0.0
        %737 = vmatpush1.msra.mxu0 0.0
        %738 = vmatprep.subr.mxu0 0.0
        %739 = vmatpush1.msra.mxu0 0.0
        %740 = vmatprep.subr.mxu0 0.0
        %741 = vmatpush1.msra.mxu0 0.0
        %742 = vmatprep.subr.mxu0 0.0
        %743 = vmatpush1.msra.mxu0 0.0
        %744 = vmatprep.subr.mxu0 0.0
        %745 = vmatpush1.msra.mxu0 0.0
        %746 = vmatprep.subr.mxu0 0.0
        %747 = vmatpush1.msra.mxu0 0.0
        %748 = vmatprep.subr.mxu0 0.0
        %749 = vmatpush1.msra.mxu0 0.0
        %750 = vmatprep.subr.mxu0 0.0
        %751 = vmatpush1.msra.mxu0 0.0
        %752 = vmatprep.subr.mxu0 0.0
        %753 = vmatpush1.msra.mxu0 0.0
        %754 = vmatprep.subr.mxu0 0.0
        %755 = vmatpush1.msra.mxu0 0.0
        %756 = vmatprep.subr.mxu0 0.0
        %757 = vmatpush1.msra.mxu0 0.0
        %758 = vmatprep.subr.mxu0 0.0
        %759 = vmatpush1.msra.mxu0 0.0
        %760 = vmatprep.subr.mxu0 0.0
        %761 = vmatpush1.msra.mxu0 0.0
        %762 = vmatprep.subr.mxu0 0.0
        %763 = vmatpush1.msra.mxu0 0.0
        %764 = vmatprep.subr.mxu0 0.0
        %765 = vmatpush1.msra.mxu0 0.0
        %766 = vmatprep.subr.mxu0 0.0
        %767 = vmatpush1.msra.mxu0 0.0
        %768 = vmatprep.subr.mxu0 0.0
        %769 = vmatpush1.msra.mxu0 0.0
        %770 = vmatprep.subr.mxu0 0.0
        %771 = vmatpush1.msra.mxu0 0.0
        %772 = vmatprep.subr.mxu0 0.0
        %773 = vmatpush1.msra.mxu0 0.0
        %774 = vmatprep.subr.mxu0 0.0
        %775 = vmatpush1.msra.mxu0 0.0
        %776 = vmatprep.subr.mxu0 0.0
        %777 = vmatpush1.msra.mxu0 0.0
        %778 = vmatprep.subr.mxu0 0.0
        %779 = vmatpush1.msra.mxu0 0.0
        %780 = vmatprep.subr.mxu0 0.0
        %781 = vmatpush1.msra.mxu0 0.0
        %782 = vmatprep.subr.mxu0 0.0
        %783 = vmatpush1.msra.mxu0 0.0
        %784 = vmatprep.subr.mxu0 0.0
        %785 = vmatpush1.msra.mxu0 0.0
        %786 = vmatprep.subr.mxu0 0.0
        %787 = vmatpush1.msra.mxu0 0.0
        %788 = vmatprep.subr.mxu0 0.0
        %789 = vmatpush1.msra.mxu0 0.0
        %790 = vmatprep.mubr.f32.mxu0 0.0
        %791 = vmatmul.mubr.f32.gmra.mrb[0].mxu0 %v374
        %v792 = vpop.f32.mrb[0].mxu0
        %v793 = vadd.f32 %v363, %v792
        %v794 = vpop.f32.mrb[0].mxu0
        %v795 = vadd.f32 %v367, %v794
        %796 = vmatprep.mubr.f32.mxu0 0.0
        %797 = vmatmul.mubr.f32.gmra.mrb[0].mxu0 %v377
        %v798 = vpop.f32.mrb[0].mxu0
        %v799 = vadd.f32 %v363, %v798
        %v800 = vpop.f32.mrb[0].mxu0
        %v801 = vadd.f32 %v367, %v800
        %802 = vmatprep.mubr.f32.mxu0 0.0
        %803 = vmatmul.mubr.f32.gmra.mrb[0].mxu0 %v380
        %v804 = vpop.f32.mrb[0].mxu0
        %v805 = vadd.f32 %v363, %v804
        %v806 = vpop.f32.mrb[0].mxu0
        %v807 = vadd.f32 %v367, %v806
        %808 = vmatprep.mubr.f32.mxu0 0.0
        %809 = vmatmul.mubr.f32.gmra.mrb[0].mxu0 %v383
        %v810 = vpop.f32.mrb[0].mxu0
        %v811 = vadd.f32 %v363, %v810
        %v812 = vpop.f32.mrb[0].mxu0
        %v813 = vadd.f32 %v367, %v812
        %814 = vmatprep.mubr.f32.mxu0 0.0
        %815 = vmatmul.mubr.f32.gmra.mrb[0].mxu0 %v386
        %v816 = vpop.f32.mrb[0].mxu0
        %v817 = vadd.f32 %v363, %v816
        %v818 = vpop.f32.mrb[0].mxu0
        %v819 = vadd.f32 %v367, %v818
        %820 = vmatprep.mubr.f32.mxu0 0.0
        %821 = vmatmul.mubr.f32.gmra.mrb[0].mxu0 %v389
        %v822 = vpop.f32.mrb[0].mxu0
        %v823 = vadd.f32 %v363, %v822
        %v824 = vpop.f32.mrb[0].mxu0
        %v825 = vadd.f32 %v367, %v824
        %826 = vmatprep.mubr.f32.mxu0 0.0
        %827 = vmatmul.mubr.f32.gmra.mrb[0].mxu0 %v392
        %v828 = vpop.f32.mrb[0].mxu0
        %v829 = vadd.f32 %v363, %v828
        %v830 = vpop.f32.mrb[0].mxu0
        %v831 = vadd.f32 %v367, %v830
        %832 = vmatprep.mubr.f32.mxu0 0.0
        %833 = vmatmul.mubr.f32.gmra.mrb[0].mxu0 %v395
        %v834 = vpop.f32.mrb[0].mxu0
        %v835 = vadd.f32 %v363, %v834
        %v836 = vpop.f32.mrb[0].mxu0
        %v837 = vadd.f32 %v367, %v836
        %838 = vmatprep.mubr.f32.mxu0 0.0
        %839 = vmatmul.mubr.f32.gmra.mrb[0].mxu0 %v398
        %v840 = vpop.f32.mrb[0].mxu0
        %v841 = vadd.f32 %v363, %v840
        %v842 = vpop.f32.mrb[0].mxu0
        %v843 = vadd.f32 %v367, %v842
        %844 = vmatprep.mubr.f32.mxu0 0.0
        %845 = vmatmul.mubr.f32.gmra.mrb[0].mxu0 %v401
        %v846 = vpop.f32.mrb[0].mxu0
        %v847 = vadd.f32 %v363, %v846
        %v848 = vpop.f32.mrb[0].mxu0
        %v849 = vadd.f32 %v367, %v848
        %850 = vmatprep.mubr.f32.mxu0 0.0
        %851 = vmatmul.mubr.f32.gmra.mrb[0].mxu0 %v404
        %v852 = vpop.f32.mrb[0].mxu0
        %v853 = vadd.f32 %v363, %v852
        %v854 = vpop.f32.mrb[0].mxu0
        %v855 = vadd.f32 %v367, %v854
        %856 = vmatprep.mubr.f32.mxu0 0.0
        %857 = vmatmul.mubr.f32.gmra.mrb[0].mxu0 %v407
        %v858 = vpop.f32.mrb[0].mxu0
        %v859 = vadd.f32 %v363, %v858
        %v860 = vpop.f32.mrb[0].mxu0
        %v861 = vadd.f32 %v367, %v860
        %862 = vmatprep.mubr.f32.mxu0 0.0
        %863 = vmatmul.mubr.f32.gmra.mrb[0].mxu0 %v410
        %v864 = vpop.f32.mrb[0].mxu0
        %v865 = vadd.f32 %v363, %v864
        %v866 = vpop.f32.mrb[0].mxu0
        %v867 = vadd.f32 %v367, %v866
        %868 = vmatprep.mubr.f32.mxu0 0.0
        %869 = vmatmul.mubr.f32.gmra.mrb[0].mxu0 %v413
        %v870 = vpop.f32.mrb[0].mxu0
        %v871 = vadd.f32 %v363, %v870
        %v872 = vpop.f32.mrb[0].mxu0
        %v873 = vadd.f32 %v367, %v872
        %874 = vmatprep.mubr.f32.mxu0 0.0
        %875 = vmatmul.mubr.f32.gmra.mrb[0].mxu0 %v416
        %v876 = vpop.f32.mrb[0].mxu0
        %v877 = vadd.f32 %v363, %v876
        %v878 = vpop.f32.mrb[0].mxu0
        %v879 = vadd.f32 %v367, %v878
        %880 = vmatprep.mubr.f32.mxu0 0.0
        %881 = vmatmul.mubr.f32.gmra.mrb[0].mxu0 %v419
        %v882 = vpop.f32.mrb[0].mxu0
        %v883 = vadd.f32 %v363, %v882
        %v884 = vpop.f32.mrb[0].mxu0
        %v885 = vadd.f32 %v367, %v884
        %886 = vmatprep.mubr.f32.mxu0 0.0
        %887 = vmatmul.mubr.f32.gmra.mrb[0].mxu0 %v422
        %v888 = vpop.f32.mrb[0].mxu0
        %v889 = vadd.f32 %v363, %v888
        %v890 = vpop.f32.mrb[0].mxu0
        %v891 = vadd.f32 %v367, %v890
        %892 = vmatprep.mubr.f32.mxu0 0.0
        %893 = vmatmul.mubr.f32.gmra.mrb[0].mxu0 %v425
        %v894 = vpop.f32.mrb[0].mxu0
        %v895 = vadd.f32 %v363, %v894
        %v896 = vpop.f32.mrb[0].mxu0
        %v897 = vadd.f32 %v367, %v896
        %898 = vmatprep.mubr.f32.mxu0 0.0
        %899 = vmatmul.mubr.f32.gmra.mrb[0].mxu0 %v428
        %v900 = vpop.f32.mrb[0].mxu0
        %v901 = vadd.f32 %v363, %v900
        %v902 = vpop.f32.mrb[0].mxu0
        %v903 = vadd.f32 %v367, %v902
        %904 = vmatprep.mubr.f32.mxu0 0.0
        %905 = vmatmul.mubr.f32.gmra.mrb[0].mxu0 %v431
        %v906 = vpop.f32.mrb[0].mxu0
        %v907 = vadd.f32 %v363, %v906
        %v908 = vpop.f32.mrb[0].mxu0
        %v909 = vadd.f32 %v367, %v908
        %910 = vmatprep.mubr.f32.mxu0 0.0
        %911 = vmatmul.mubr.f32.gmra.mrb[0].mxu0 %v434
        %v912 = vpop.f32.mrb[0].mxu0
        %v913 = vadd.f32 %v363, %v912
        %v914 = vpop.f32.mrb[0].mxu0
        %v915 = vadd.f32 %v367, %v914
        %916 = vmatprep.mubr.f32.mxu0 0.0
        %917 = vmatmul.mubr.f32.gmra.mrb[0].mxu0 %v437
        %v918 = vpop.f32.mrb[0].mxu0
        %v919 = vadd.f32 %v363, %v918
        %v920 = vpop.f32.mrb[0].mxu0
        %v921 = vadd.f32 %v367, %v920
        %922 = vmatprep.mubr.f32.mxu0 0.0
        %923 = vmatmul.mubr.f32.gmra.mrb[0].mxu0 %v440
        %v924 = vpop.f32.mrb[0].mxu0
        %v925 = vadd.f32 %v363, %v924
        %v926 = vpop.f32.mrb[0].mxu0
        %v927 = vadd.f32 %v367, %v926
        %928 = vmatprep.mubr.f32.mxu0 0.0
        %929 = vmatmul.mubr.f32.gmra.mrb[0].mxu0 %v443
        %v930 = vpop.f32.mrb[0].mxu0
        %v931 = vadd.f32 %v363, %v930
        %v932 = vpop.f32.mrb[0].mxu0
        %v933 = vadd.f32 %v367, %v932
        %934 = vmatprep.mubr.f32.mxu0 0.0
        %935 = vmatmul.mubr.f32.gmra.mrb[0].mxu0 %v446
        %v936 = vpop.f32.mrb[0].mxu0
        %v937 = vadd.f32 %v363, %v936
        %v938 = vpop.f32.mrb[0].mxu0
        %v939 = vadd.f32 %v367, %v938
        %940 = vmatprep.mubr.f32.mxu0 0.0
        %941 = vmatmul.mubr.f32.gmra.mrb[0].mxu0 %v449
        %v942 = vpop.f32.mrb[0].mxu0
        %v943 = vadd.f32 %v363, %v942
        %v944 = vpop.f32.mrb[0].mxu0
        %v945 = vadd.f32 %v367, %v944
        %946 = vmatprep.mubr.f32.mxu0 0.0
        %947 = vmatmul.mubr.f32.gmra.mrb[0].mxu0 %v452
        %v948 = vpop.f32.mrb[0].mxu0
        %v949 = vadd.f32 %v363, %v948
        %v950 = vpop.f32.mrb[0].mxu0
        %v951 = vadd.f32 %v367, %v950
        %952 = vmatprep.mubr.f32.mxu0 0.0
        %953 = vmatmul.mubr.f32.gmra.mrb[0].mxu0 %v455
        %v954 = vpop.f32.mrb[0].mxu0
        %v955 = vadd.f32 %v363, %v954
        %v956 = vpop.f32.mrb[0].mxu0
        %v957 = vadd.f32 %v367, %v956
        %958 = vmatprep.mubr.f32.mxu0 0.0
        %959 = vmatmul.mubr.f32.gmra.mrb[0].mxu0 %v458
        %v960 = vpop.f32.mrb[0].mxu0
        %v961 = vadd.f32 %v363, %v960
        %v962 = vpop.f32.mrb[0].mxu0
        %v963 = vadd.f32 %v367, %v962
        %964 = vmatprep.mubr.f32.mxu0 0.0
        %965 = vmatmul.mubr.f32.gmra.mrb[0].mxu0 %v461
        %v966 = vpop.f32.mrb[0].mxu0
        %v967 = vadd.f32 %v363, %v966
        %v968 = vpop.f32.mrb[0].mxu0
        %v969 = vadd.f32 %v367, %v968
        %970 = vmatprep.mubr.f32.mxu0 0.0
        %971 = vmatmul.mubr.f32.gmra.mrb[0].mxu0 %v464
        %v972 = vpop.f32.mrb[0].mxu0
        %v973 = vadd.f32 %v363, %v972
        %v974 = vpop.f32.mrb[0].mxu0
        %v975 = vadd.f32 %v367, %v974
        %976 = vmatprep.mubr.f32.mxu0 0.0
        %977 = vmatmul.mubr.f32.gmra.mrb[0].mxu0 %v467
        %v978 = vpop.f32.mrb[0].mxu0
        %v979 = vadd.f32 %v363, %v978
        %v980 = vpop.f32.mrb[0].mxu0
        %v981 = vadd.f32 %v367, %v980
        %982 = vdwg.mxu0
        %v983 = vld [vmem:[%s242] sm:$0xff]
        %v984 = vld [vmem:[%s242 + $0x8] sm:$0xff]
        %v985 = vld [vmem:[%s242 + $0x10] sm:$0xff]
        %v986 = vld [vmem:[%s242 + $0x18] sm:$0xff]
        %v987 = vld [vmem:[%s242 + $0x20] sm:$0xff]
        %v988 = vld [vmem:[%s242 + $0x28] sm:$0xff]
        %v989 = vld [vmem:[%s242 + $0x30] sm:$0xff]
        %v990 = vld [vmem:[%s242 + $0x38] sm:$0xff]
        %v991 = vld [vmem:[%s242 + $0x40] sm:$0xff]
        %v992 = vld [vmem:[%s242 + $0x48] sm:$0xff]
        %v993 = vld [vmem:[%s242 + $0x50] sm:$0xff]
        %v994 = vld [vmem:[%s242 + $0x58] sm:$0xff]
        %v995 = vld [vmem:[%s242 + $0x60] sm:$0xff]
        %v996 = vld [vmem:[%s242 + $0x68] sm:$0xff]
        %v997 = vld [vmem:[%s242 + $0x70] sm:$0xff]
        %v998 = vld [vmem:[%s242 + $0x78] sm:$0xff]
        %v999 = vld [vmem:[%s242 + $0x80] sm:$0xff]
        %v1000 = vld [vmem:[%s242 + $0x88] sm:$0xff]
        %v1001 = vld [vmem:[%s242 + $0x90] sm:$0xff]
        %v1002 = vld [vmem:[%s242 + $0x98] sm:$0xff]
        %v1003 = vld [vmem:[%s242 + $0xa0] sm:$0xff]
        %v1004 = vld [vmem:[%s242 + $0xa8] sm:$0xff]
        %v1005 = vld [vmem:[%s242 + $0xb0] sm:$0xff]
        %v1006 = vld [vmem:[%s242 + $0xb8] sm:$0xff]
        %v1007 = vld [vmem:[%s242 + $0xc0] sm:$0xff]
        %v1008 = vld [vmem:[%s242 + $0xc8] sm:$0xff]
        %v1009 = vld [vmem:[%s242 + $0xd0] sm:$0xff]
        %v1010 = vld [vmem:[%s242 + $0xd8] sm:$0xff]
        %v1011 = vld [vmem:[%s242 + $0xe0] sm:$0xff]
        %v1012 = vld [vmem:[%s242 + $0xe8] sm:$0xff]
        %v1013 = vld [vmem:[%s242 + $0xf0] sm:$0xff]
        %v1014 = vld [vmem:[%s242 + $0xf8] sm:$0xff]
        %v1015 = vld [vmem:[%s242 + $0x100] sm:$0xff]
        %v1016 = vld [vmem:[%s242 + $0x108] sm:$0xff]
        %v1017 = vld [vmem:[%s242 + $0x110] sm:$0xff]
        %v1018 = vld [vmem:[%s242 + $0x118] sm:$0xff]
        %v1019 = vld [vmem:[%s242 + $0x120] sm:$0xff]
        %v1020 = vld [vmem:[%s242 + $0x128] sm:$0xff]
        %v1021 = vld [vmem:[%s242 + $0x130] sm:$0xff]
        %v1022 = vld [vmem:[%s242 + $0x138] sm:$0xff]
        %v1023 = vld [vmem:[%s242 + $0x140] sm:$0xff]
        %v1024 = vld [vmem:[%s242 + $0x148] sm:$0xff]
        %v1025 = vld [vmem:[%s242 + $0x150] sm:$0xff]
        %v1026 = vld [vmem:[%s242 + $0x158] sm:$0xff]
        %v1027 = vld [vmem:[%s242 + $0x160] sm:$0xff]
        %v1028 = vld [vmem:[%s242 + $0x168] sm:$0xff]
        %v1029 = vld [vmem:[%s242 + $0x170] sm:$0xff]
        %v1030 = vld [vmem:[%s242 + $0x178] sm:$0xff]
        %v1031 = vld [vmem:[%s242 + $0x180] sm:$0xff]
        %v1032 = vld [vmem:[%s242 + $0x188] sm:$0xff]
        %v1033 = vld [vmem:[%s242 + $0x190] sm:$0xff]
        %v1034 = vld [vmem:[%s242 + $0x198] sm:$0xff]
        %v1035 = vld [vmem:[%s242 + $0x1a0] sm:$0xff]
        %v1036 = vld [vmem:[%s242 + $0x1a8] sm:$0xff]
        %v1037 = vld [vmem:[%s242 + $0x1b0] sm:$0xff]
        %v1038 = vld [vmem:[%s242 + $0x1b8] sm:$0xff]
        %v1039 = vld [vmem:[%s242 + $0x1c0] sm:$0xff]
        %v1040 = vld [vmem:[%s242 + $0x1c8] sm:$0xff]
        %v1041 = vld [vmem:[%s242 + $0x1d0] sm:$0xff]
        %v1042 = vld [vmem:[%s242 + $0x1d8] sm:$0xff]
        %v1043 = vld [vmem:[%s242 + $0x1e0] sm:$0xff]
        %v1044 = vld [vmem:[%s242 + $0x1e8] sm:$0xff]
        %v1045 = vld [vmem:[%s242 + $0x1f0] sm:$0xff]
        %v1046 = vld [vmem:[%s242 + $0x1f8] sm:$0xff]
        %v1047 = vmul.f32 %v536, %v983
        %v1048 = vmul.f32 %v538, %v984
        %v1049 = vmul.f32 %v542, %v985
        %v1050 = vmul.f32 %v544, %v986
        %v1051 = vmul.f32 %v548, %v987
        %v1052 = vmul.f32 %v550, %v988
        %v1053 = vmul.f32 %v554, %v989
        %v1054 = vmul.f32 %v556, %v990
        %v1055 = vmul.f32 %v560, %v991
        %v1056 = vmul.f32 %v562, %v992
        %v1057 = vmul.f32 %v566, %v993
        %v1058 = vmul.f32 %v568, %v994
        %v1059 = vmul.f32 %v572, %v995
        %v1060 = vmul.f32 %v574, %v996
        %v1061 = vmul.f32 %v578, %v997
        %v1062 = vmul.f32 %v580, %v998
        %v1063 = vmul.f32 %v584, %v999
        %v1064 = vmul.f32 %v586, %v1000
        %v1065 = vmul.f32 %v590, %v1001
        %v1066 = vmul.f32 %v592, %v1002
        %v1067 = vmul.f32 %v596, %v1003
        %v1068 = vmul.f32 %v598, %v1004
        %v1069 = vmul.f32 %v602, %v1005
        %v1070 = vmul.f32 %v604, %v1006
        %v1071 = vmul.f32 %v608, %v1007
        %v1072 = vmul.f32 %v610, %v1008
        %v1073 = vmul.f32 %v614, %v1009
        %v1074 = vmul.f32 %v616, %v1010
        %v1075 = vmul.f32 %v620, %v1011
        %v1076 = vmul.f32 %v622, %v1012
        %v1077 = vmul.f32 %v626, %v1013
        %v1078 = vmul.f32 %v628, %v1014
        %v1079 = vmul.f32 %v632, %v1015
        %v1080 = vmul.f32 %v634, %v1016
        %v1081 = vmul.f32 %v638, %v1017
        %v1082 = vmul.f32 %v640, %v1018
        %v1083 = vmul.f32 %v644, %v1019
        %v1084 = vmul.f32 %v646, %v1020
        %v1085 = vmul.f32 %v650, %v1021
        %v1086 = vmul.f32 %v652, %v1022
        %v1087 = vmul.f32 %v656, %v1023
        %v1088 = vmul.f32 %v658, %v1024
        %v1089 = vmul.f32 %v662, %v1025
        %v1090 = vmul.f32 %v664, %v1026
        %v1091 = vmul.f32 %v668, %v1027
        %v1092 = vmul.f32 %v670, %v1028
        %v1093 = vmul.f32 %v674, %v1029
        %v1094 = vmul.f32 %v676, %v1030
        %v1095 = vmul.f32 %v680, %v1031
        %v1096 = vmul.f32 %v682, %v1032
        %v1097 = vmul.f32 %v686, %v1033
        %v1098 = vmul.f32 %v688, %v1034
        %v1099 = vmul.f32 %v692, %v1035
        %v1100 = vmul.f32 %v694, %v1036
        %v1101 = vmul.f32 %v698, %v1037
        %v1102 = vmul.f32 %v700, %v1038
        %v1103 = vmul.f32 %v704, %v1039
        %v1104 = vmul.f32 %v706, %v1040
        %v1105 = vmul.f32 %v710, %v1041
        %v1106 = vmul.f32 %v712, %v1042
        %v1107 = vmul.f32 %v716, %v1043
        %v1108 = vmul.f32 %v718, %v1044
        %v1109 = vmul.f32 %v722, %v1045
        %v1110 = vmul.f32 %v724, %v1046
        %v1111 = vadd.f32 %v1047, %v793
        %v1112 = vadd.f32 %v1048, %v795
        %v1113 = vadd.f32 %v1049, %v799
        %v1114 = vadd.f32 %v1050, %v801
        %v1115 = vadd.f32 %v1051, %v805
        %v1116 = vadd.f32 %v1052, %v807
        %v1117 = vadd.f32 %v1053, %v811
        %v1118 = vadd.f32 %v1054, %v813
        %v1119 = vadd.f32 %v1055, %v817
        %v1120 = vadd.f32 %v1056, %v819
        %v1121 = vadd.f32 %v1057, %v823
        %v1122 = vadd.f32 %v1058, %v825
        %v1123 = vadd.f32 %v1059, %v829
        %v1124 = vadd.f32 %v1060, %v831
        %v1125 = vadd.f32 %v1061, %v835
        %v1126 = vadd.f32 %v1062, %v837
        %v1127 = vadd.f32 %v1063, %v841
        %v1128 = vadd.f32 %v1064, %v843
        %v1129 = vadd.f32 %v1065, %v847
        %v1130 = vadd.f32 %v1066, %v849
        %v1131 = vadd.f32 %v1067, %v853
        %v1132 = vadd.f32 %v1068, %v855
        %v1133 = vadd.f32 %v1069, %v859
        %v1134 = vadd.f32 %v1070, %v861
        %v1135 = vadd.f32 %v1071, %v865
        %v1136 = vadd.f32 %v1072, %v867
        %v1137 = vadd.f32 %v1073, %v871
        %v1138 = vadd.f32 %v1074, %v873
        %v1139 = vadd.f32 %v1075, %v877
        %v1140 = vadd.f32 %v1076, %v879
        %v1141 = vadd.f32 %v1077, %v883
        %v1142 = vadd.f32 %v1078, %v885
        %v1143 = vadd.f32 %v1079, %v889
        %v1144 = vadd.f32 %v1080, %v891
        %v1145 = vadd.f32 %v1081, %v895
        %v1146 = vadd.f32 %v1082, %v897
        %v1147 = vadd.f32 %v1083, %v901
        %v1148 = vadd.f32 %v1084, %v903
        %v1149 = vadd.f32 %v1085, %v907
        %v1150 = vadd.f32 %v1086, %v909
        %v1151 = vadd.f32 %v1087, %v913
        %v1152 = vadd.f32 %v1088, %v915
        %v1153 = vadd.f32 %v1089, %v919
        %v1154 = vadd.f32 %v1090, %v921
        %v1155 = vadd.f32 %v1091, %v925
        %v1156 = vadd.f32 %v1092, %v927
        %v1157 = vadd.f32 %v1093, %v931
        %v1158 = vadd.f32 %v1094, %v933
        %v1159 = vadd.f32 %v1095, %v937
        %v1160 = vadd.f32 %v1096, %v939
        %v1161 = vadd.f32 %v1097, %v943
        %v1162 = vadd.f32 %v1098, %v945
        %v1163 = vadd.f32 %v1099, %v949
        %v1164 = vadd.f32 %v1100, %v951
        %v1165 = vadd.f32 %v1101, %v955
        %v1166 = vadd.f32 %v1102, %v957
        %v1167 = vadd.f32 %v1103, %v961
        %v1168 = vadd.f32 %v1104, %v963
        %v1169 = vadd.f32 %v1105, %v967
        %v1170 = vadd.f32 %v1106, %v969
        %v1171 = vadd.f32 %v1107, %v973
        %v1172 = vadd.f32 %v1108, %v975
        %v1173 = vadd.f32 %v1109, %v979
        %v1174 = vadd.f32 %v1110, %v981
        %1175 = vst [vmem:[%s280] sm:$0xff] %v1111
        %1176 = vst [vmem:[%s280 + $0x8] sm:$0xff] %v1112
        %1177 = vst [vmem:[%s280 + $0x10] sm:$0xff] %v1113
        %1178 = vst [vmem:[%s280 + $0x18] sm:$0xff] %v1114
        %1179 = vst [vmem:[%s280 + $0x20] sm:$0xff] %v1115
        %1180 = vst [vmem:[%s280 + $0x28] sm:$0xff] %v1116
        %1181 = vst [vmem:[%s280 + $0x30] sm:$0xff] %v1117
        %1182 = vst [vmem:[%s280 + $0x38] sm:$0xff] %v1118
        %1183 = vst [vmem:[%s280 + $0x40] sm:$0xff] %v1119
        %1184 = vst [vmem:[%s280 + $0x48] sm:$0xff] %v1120
        %1185 = vst [vmem:[%s280 + $0x50] sm:$0xff] %v1121
        %1186 = vst [vmem:[%s280 + $0x58] sm:$0xff] %v1122
        %1187 = vst [vmem:[%s280 + $0x60] sm:$0xff] %v1123
        %1188 = vst [vmem:[%s280 + $0x68] sm:$0xff] %v1124
        %1189 = vst [vmem:[%s280 + $0x70] sm:$0xff] %v1125
        %1190 = vst [vmem:[%s280 + $0x78] sm:$0xff] %v1126
        %1191 = vst [vmem:[%s280 + $0x80] sm:$0xff] %v1127
        %1192 = vst [vmem:[%s280 + $0x88] sm:$0xff] %v1128
        %1193 = vst [vmem:[%s280 + $0x90] sm:$0xff] %v1129
        %1194 = vst [vmem:[%s280 + $0x98] sm:$0xff] %v1130
        %1195 = vst [vmem:[%s280 + $0xa0] sm:$0xff] %v1131
        %1196 = vst [vmem:[%s280 + $0xa8] sm:$0xff] %v1132
        %1197 = vst [vmem:[%s280 + $0xb0] sm:$0xff] %v1133
        %1198 = vst [vmem:[%s280 + $0xb8] sm:$0xff] %v1134
        %1199 = vst [vmem:[%s280 + $0xc0] sm:$0xff] %v1135
        %1200 = vst [vmem:[%s280 + $0xc8] sm:$0xff] %v1136
        %1201 = vst [vmem:[%s280 + $0xd0] sm:$0xff] %v1137
        %1202 = vst [vmem:[%s280 + $0xd8] sm:$0xff] %v1138
        %1203 = vst [vmem:[%s280 + $0xe0] sm:$0xff] %v1139
        %1204 = vst [vmem:[%s280 + $0xe8] sm:$0xff] %v1140
        %1205 = vst [vmem:[%s280 + $0xf0] sm:$0xff] %v1141
        %1206 = vst [vmem:[%s280 + $0xf8] sm:$0xff] %v1142
        %1207 = vst [vmem:[%s280 + $0x100] sm:$0xff] %v1143
        %1208 = vst [vmem:[%s280 + $0x108] sm:$0xff] %v1144
        %1209 = vst [vmem:[%s280 + $0x110] sm:$0xff] %v1145
        %1210 = vst [vmem:[%s280 + $0x118] sm:$0xff] %v1146
        %1211 = vst [vmem:[%s280 + $0x120] sm:$0xff] %v1147
        %1212 = vst [vmem:[%s280 + $0x128] sm:$0xff] %v1148
        %1213 = vst [vmem:[%s280 + $0x130] sm:$0xff] %v1149
        %1214 = vst [vmem:[%s280 + $0x138] sm:$0xff] %v1150
        %1215 = vst [vmem:[%s280 + $0x140] sm:$0xff] %v1151
        %1216 = vst [vmem:[%s280 + $0x148] sm:$0xff] %v1152
        %1217 = vst [vmem:[%s280 + $0x150] sm:$0xff] %v1153
        %1218 = vst [vmem:[%s280 + $0x158] sm:$0xff] %v1154
        %1219 = vst [vmem:[%s280 + $0x160] sm:$0xff] %v1155
        %1220 = vst [vmem:[%s280 + $0x168] sm:$0xff] %v1156
        %1221 = vst [vmem:[%s280 + $0x170] sm:$0xff] %v1157
        %1222 = vst [vmem:[%s280 + $0x178] sm:$0xff] %v1158
        %1223 = vst [vmem:[%s280 + $0x180] sm:$0xff] %v1159
        %1224 = vst [vmem:[%s280 + $0x188] sm:$0xff] %v1160
        %1225 = vst [vmem:[%s280 + $0x190] sm:$0xff] %v1161
        %1226 = vst [vmem:[%s280 + $0x198] sm:$0xff] %v1162
        %1227 = vst [vmem:[%s280 + $0x1a0] sm:$0xff] %v1163
        %1228 = vst [vmem:[%s280 + $0x1a8] sm:$0xff] %v1164
        %1229 = vst [vmem:[%s280 + $0x1b0] sm:$0xff] %v1165
        %1230 = vst [vmem:[%s280 + $0x1b8] sm:$0xff] %v1166
        %1231 = vst [vmem:[%s280 + $0x1c0] sm:$0xff] %v1167
        %1232 = vst [vmem:[%s280 + $0x1c8] sm:$0xff] %v1168
        %1233 = vst [vmem:[%s280 + $0x1d0] sm:$0xff] %v1169
        %1234 = vst [vmem:[%s280 + $0x1d8] sm:$0xff] %v1170
        %1235 = vst [vmem:[%s280 + $0x1e0] sm:$0xff] %v1171
        %1236 = vst [vmem:[%s280 + $0x1e8] sm:$0xff] %v1172
        %1237 = vst [vmem:[%s280 + $0x1f0] sm:$0xff] %v1173
        %1238 = vst [vmem:[%s280 + $0x1f8] sm:$0xff] %v1174
        %s1239 = sand.u32 %s149, 1
        %s1240 = scalar_lea.sflag [#allocation4], %s1239
        %s1241 = sand.u32 %s149, 1
        %s1242 = smul.addr %s1241, 512
        %s1243 = scalar_lea.vmem [#allocation5], %s1242
        // Predicated region
        $region41: #{tpu_custom_call.1} parent=35 // pred_check
          %p1244 = pneg %p159
        $region42: #{tpu_custom_call.1} parent=35 // pred_check_branch
          %1246 = sbr.rel (%p1244) target = $region44
        $region43: #{tpu_custom_call.1} parent=35 // pred_region
          %s1247 = smul.u32 32, %s25
          %s1248 = smul.u32 2, %s26
          %s1250 = ssub.s32 8192, 8192
          %1251 = vsyncadd %s1240, %s1250
          %s1252 = smul.addr %s1247, 2
          %s1253 = sadd.s32 %s1248, %s1252
          %s1254 = smul.addr %s1253, 128
          %s1255 = scalar_lea.hbm %s4, %s1254
          %s1256 = sshll.u32 %s1243, 4
          %s1257 = int_to_ptr.vmem [resolvable:$true] %s1256
          %1262 = dma.vmem_to_hbm [thread:$0]  %s1257, 8192, %s1255, %s1240, 256, 256, 16
        $region44: #{tpu_custom_call.1} parent=35 // pred_fallthru
          _
      $region36: #{tpu_custom_call.1} parent=5 // pred_fallthru
        _
      %p1263 = scmp.le.s32.totalorder 2, %s16
      // Predicated region
      $region45: #{tpu_custom_call.1} parent=5 // pred_check
        %p1264 = pneg %p1263
      $region46: #{tpu_custom_call.1} parent=5 // pred_check_branch
        %1266 = sbr.rel (%p1264) target = $region48
      $region47: #{tpu_custom_call.1} parent=5 // pred_region
        %s1267 = ssub.s32 %s16, 2
        // Predicated region
        $region49: #{tpu_custom_call.1} parent=47 // pred_check
          %p1268 = pneg %p165
        $region50: #{tpu_custom_call.1} parent=47 // pred_check_branch
          %1270 = sbr.rel (%p1268) target = $region52
        $region51: #{tpu_custom_call.1} parent=47 // pred_region
          %s1271 = sand.u32 %s150, 1
          %s1272 = scalar_lea.sflag [#allocation4], %s1271
          %s1273 = sand.u32 %s150, 1
          %s1274 = smul.addr %s1273, 512
          %s1275 = scalar_lea.vmem [#allocation5], %s1274
          %1276 = dma.done %s1272, 8192
        $region52: #{tpu_custom_call.1} parent=47 // pred_fallthru
          _
      $region48: #{tpu_custom_call.1} parent=5 // pred_fallthru
        _
    $region6: #{tpu_custom_call.1} parent=1 // loop_footer
      %s20 = sadd.s32 1, %s16
    $region7: #{tpu_custom_call.1} parent=1 // loop_footer_branch
      %15 = sbr.rel target = $region3
    $region8: #{tpu_custom_call.1} parent=1 // loop_exit
      _
    %1277 = vsyncpa [#allocation3], 1
    %s1278 = scalar_lea.sflag [#allocation3], 1
    %1279 = vsyncpa %s1278, 1
    %1280 = vsyncpa [#allocation4], 1
    %s1281 = scalar_lea.sflag [#allocation4], 1
    %1282 = vsyncpa %s1281, 1

</llo_original>
